<compile_context>
chip_gen: v7x
topology: tpu7x:2x2x1
jax: 0.10.0
libtpu: 0.0.40
codegen_flags: <defaults>
</compile_context>

<pallas_src>
import jax
import jax.numpy as jnp
from jax.experimental import pallas as pl
from jax.experimental.pallas import tpu as pltpu

_HIDDEN = 64  # nn.Linear(n_mfcc + n_mels, 64)


# ----------------------------------------------------------------------------
# Kernels
# ----------------------------------------------------------------------------
def _fusion_kernel_packed(xm_ref, xl_ref, w1a_ref, w1b_ref, b1_ref,
                          w2d_ref, b2d_ref, e_ref, out_ref):
    """Lane-dense path (feature dim divides 128 after padding).

    xm/xl/out : (TP, 128) packed rows; each 128-lane row holds rpv = 128//F_pad
                logical rows laid out contiguously.
    w1a/w1b   : (128, NH) block-diagonal (kron) expansion of the W1 halves, in
                the matmul dtype (bf16 by default).
    b1        : (1, NH)   w2d : (NH, rpv)   b2d : (1, rpv)   e : (rpv, 128)
    """
    xm = xm_ref[...]
    xl = xl_ref[...]
    mm_dtype = w1a_ref.dtype

    # combined @ W1 == mfcc @ W1[:F] + mel @ W1[F:], applied per logical row
    # through the block-diagonal expansion (one MXU pass each, f32 accumulate).
    # TODO(synk): optionally fuse the two K=128 dots into one K=256 dot on
    # v6e/v7x if a bundle dump ever shows the MXU-push slot binding.
    h = (jnp.dot(xm.astype(mm_dtype), w1a_ref[...],
                 preferred_element_type=jnp.float32)
         + jnp.dot(xl.astype(mm_dtype), w1b_ref[...],
                   preferred_element_type=jnp.float32)
         + b1_ref[...])
    h = jnp.maximum(h, 0.0)                                    # ReLU

    # 2-class softmax over (l0, l1) == sigmoid(l0 - l1); w2d/b2d hold the
    # precomputed logit difference.  d is tiny ((TP, rpv)), exact divide is
    # negligible and keeps the f32 path bit-close to the reference.
    d = jnp.dot(h, w2d_ref[...], preferred_element_type=jnp.float32) + b2d_ref[...]
    w_mfcc = 1.0 / (1.0 + jnp.exp(-d))                         # (TP, rpv)

    # Broadcast each logical-row gate to its F_pad lanes (tiny MXU outer
    # product; keeps everything lane-dense, no in-kernel reshapes).
    w_lane = jnp.dot(w_mfcc, e_ref[...], preferred_element_type=jnp.float32)

    xm32 = xm.astype(jnp.float32)
    xl32 = xl.astype(jnp.float32)
    out_ref[...] = (xl32 + w_lane * (xm32 - xl32)).astype(out_ref.dtype)


def _fusion_kernel_rows(mfcc_ref, mel_ref, w1a_ref, w1b_ref, b1_ref,
                        w2d_ref, b2d_ref, out_ref):
    """Row-major path for F > 128 (last dim is already lane-dense)."""
    xm = mfcc_ref[...]
    xl = mel_ref[...]
    mm_dtype = w1a_ref.dtype

    h = (jnp.dot(xm.astype(mm_dtype), w1a_ref[...],
                 preferred_element_type=jnp.float32)
         + jnp.dot(xl.astype(mm_dtype), w1b_ref[...],
                   preferred_element_type=jnp.float32)
         + b1_ref[...])
    h = jnp.maximum(h, 0.0)

    d = jnp.dot(h, w2d_ref[...], preferred_element_type=jnp.float32) + b2d_ref[...]
    w_mfcc = 1.0 / (1.0 + jnp.exp(-d))                         # (TR, 1)

    xm32 = xm.astype(jnp.float32)
    xl32 = xl.astype(jnp.float32)
    out_ref[...] = (xl32 + w_mfcc * (xm32 - xl32)).astype(out_ref.dtype)


# ----------------------------------------------------------------------------
# Tiling helpers
# ----------------------------------------------------------------------------
def _round_up(x, m):
    return ((x + m - 1) // m) * m


def _sublane(dtype):
    """Minimum second-minor block granularity for this dtype (8/16/32)."""
    return max(8, 32 // jnp.dtype(dtype).itemsize)


def _choose_tiles(p, sub, cap):
    """Pick rows-per-grid-step for a (p, lanes) array.

    Returns (tile, p_pad) with tile dividing p_pad, p_pad >= p, and either
    tile % sub == 0 or tile == p_pad (single full-array step).  Prefers no
    padding and >= 2 grid steps (DMA overlap + v7x dual TensorCores).
    """
    cap = max(sub, (cap // sub) * sub)
    if p <= cap and p % sub != 0:
        return p, p                       # one step over the full array, no pad
    p_al = _round_up(p, sub)              # no-op in the aligned (common) case
    q = p_al // sub
    if q == 1:
        return p_al, p_al
    g = 1
    for cand in range(min(cap // sub, q // 2), 0, -1):
        if q % cand == 0:
            g = cand
            break
    tile = g * sub
    if tile * 16 >= p_al or tile * 2 >= cap:
        return tile, p_al                 # exact fit, no row padding
    # Degenerate divisor structure (e.g. prime row counts): one-off pad to a
    # big clean tile beats thousands of tiny grid steps.
    return cap, _round_up(p_al, cap)


# ----------------------------------------------------------------------------
# Wrapper
# ----------------------------------------------------------------------------
def feature_fusion(mfcc, mel_spec, params, *, row_tile=4096,
                   matmul_dtype=jnp.bfloat16):
    """Pallas TPU forward of FeatureFusion.

    mfcc, mel_spec : [B, T, F] (F == n_mfcc == n_mels).  Output dtype == input
    dtype (feed bf16 for the HBM-bound fast path); gate math accumulates f32.
    `row_tile` ~ logical rows per grid step at F=128 (block bytes are kept
    roughly constant across F); default fits comfortably in 32 MiB VMEM.
    """
    B, T, F = mfcc.shape
    assert mel_spec.shape == (B, T, F)
    assert mfcc.dtype == mel_spec.dtype
    R = B * T
    io_dtype = mfcc.dtype
    itemsize = jnp.dtype(io_dtype).itemsize
    sub = _sublane(io_dtype)

    w1 = params["w1"].astype(jnp.float32)      # (2F, H)
    b1 = params["b1"].astype(jnp.float32)      # (H,)
    w2 = params["w2"].astype(jnp.float32)      # (H, 2)
    b2 = params["b2"].astype(jnp.float32)      # (2,)
    H = w1.shape[1]
    w1a, w1b = w1[:F, :], w1[F:, :]
    w2_diff = w2[:, 0] - w2[:, 1]              # 2-way softmax == sigmoid(l0 - l1)
    b2_diff = b2[0] - b2[1]

    mfcc2d = mfcc.reshape(R, F)
    mel2d = mel_spec.reshape(R, F)
    cparams = pltpu.CompilerParams(dimension_semantics=("parallel",),
                                   vmem_limit_bytes=32 * 1024 * 1024)
    mm_isize = jnp.dtype(matmul_dtype).itemsize

    if F <= 128:
        # ------------------- lane-dense packed path -------------------
        F_pad = max(1, pl.next_power_of_2(F))        # divisors of 128 are 2^k
        rpv = 128 // F_pad                           # logical rows per vreg row
        NH = rpv * H

        cap = max(sub, ((row_tile * F_pad) // 128 // sub) * sub)
        R0 = R if R % rpv == 0 else _round_up(R, rpv)
        P0 = (R0 * F_pad) // 128                     # packed rows
        TP, P_pad = _choose_tiles(P0, sub, cap)
        R_pad = (P_pad * 128) // F_pad
        grid = (P_pad // TP,)

        # At most one pad per input, and none at all in the common case
        # (rows sublane-aligned and F a divisor of 128).
        if R_pad != R or F_pad != F:
            pad = ((0, R_pad - R), (0, F_pad - F))
            mfcc2d = jnp.pad(mfcc2d, pad)
            mel2d = jnp.pad(mel2d, pad)
            w1a = jnp.pad(w1a, ((0, F_pad - F), (0, 0)))
            w1b = jnp.pad(w1b, ((0, F_pad - F), (0, 0)))
        xm = mfcc2d.reshape(P_pad, 128)              # free view (contiguous)
        xl = mel2d.reshape(P_pad, 128)

        # Block-diagonal (kron) weight expansions so the packed layout feeds
        # the MXU directly; W1 halves pre-cast to the matmul dtype.
        eye = jnp.eye(rpv, dtype=jnp.float32)
        w1a_exp = jnp.kron(eye, w1a).astype(matmul_dtype)          # (128, NH)
        w1b_exp = jnp.kron(eye, w1b).astype(matmul_dtype)          # (128, NH)
        b1_exp = jnp.tile(b1, rpv).reshape(1, NH)                  # (1, NH)
        w2d_exp = jnp.kron(eye, w2_diff.reshape(H, 1))             # (NH, rpv)
        b2d_exp = jnp.full((1, rpv), b2_diff, jnp.float32)         # (1, rpv)
        expand = jnp.kron(eye, jnp.ones((1, F_pad), jnp.float32))  # (rpv, 128)

        cost = pl.CostEstimate(
            flops=int(P_pad * (2 * (2 * 128 * NH + NH * rpv + rpv * 128) + 6 * 128)),
            transcendentals=int(P_pad * rpv),
            bytes_accessed=int(3 * P_pad * 128 * itemsize
                               + 2 * 128 * NH * mm_isize
                               + (NH + NH * rpv + rpv + rpv * 128) * 4),
        )

        out_packed = pl.pallas_call(
            _fusion_kernel_packed,
            out_shape=jax.ShapeDtypeStruct((P_pad, 128), io_dtype),
            grid_spec=pltpu.PrefetchScalarGridSpec(
                num_scalar_prefetch=0,
                grid=grid,
                in_specs=[
                    pl.BlockSpec((TP, 128), lambda i: (i, 0)),     # mfcc packed
                    pl.BlockSpec((TP, 128), lambda i: (i, 0)),     # mel packed
                    pl.BlockSpec((128, NH), lambda i: (0, 0)),     # W1a (kron)
                    pl.BlockSpec((128, NH), lambda i: (0, 0)),     # W1b (kron)
                    pl.BlockSpec((1, NH), lambda i: (0, 0)),       # b1
                    pl.BlockSpec((NH, rpv), lambda i: (0, 0)),     # w2 logit diff
                    pl.BlockSpec((1, rpv), lambda i: (0, 0)),      # b2 logit diff
                    pl.BlockSpec((rpv, 128), lambda i: (0, 0)),    # lane expander
                ],
                out_specs=pl.BlockSpec((TP, 128), lambda i: (i, 0)),
            ),
            compiler_params=cparams,
            cost_estimate=cost,
        )(xm, xl, w1a_exp, w1b_exp, b1_exp, w2d_exp, b2d_exp, expand)

        out2d = out_packed.reshape(R_pad, F_pad)
        if R_pad != R or F_pad != F:
            out2d = out2d[:R, :F]
    else:
        # ------------------- row-major path (F > 128) -------------------
        cap = max(sub, ((row_tile * 128) // F // sub) * sub)
        TR, R_pad = _choose_tiles(R, sub, cap)
        grid = (R_pad // TR,)
        if R_pad != R:
            mfcc2d = jnp.pad(mfcc2d, ((0, R_pad - R), (0, 0)))
            mel2d = jnp.pad(mel2d, ((0, R_pad - R), (0, 0)))

        cost = pl.CostEstimate(
            flops=int(R_pad * (2 * (2 * F * H + H) + 6 * F)),
            transcendentals=int(R_pad),
            bytes_accessed=int(3 * R_pad * F * itemsize
                               + 2 * F * H * mm_isize + (3 * H + 2) * 4),
        )

        out_full = pl.pallas_call(
            _fusion_kernel_rows,
            out_shape=jax.ShapeDtypeStruct((R_pad, F), io_dtype),
            grid_spec=pltpu.PrefetchScalarGridSpec(
                num_scalar_prefetch=0,
                grid=grid,
                in_specs=[
                    pl.BlockSpec((TR, F), lambda i: (i, 0)),
                    pl.BlockSpec((TR, F), lambda i: (i, 0)),
                    pl.BlockSpec((F, H), lambda i: (0, 0)),
                    pl.BlockSpec((F, H), lambda i: (0, 0)),
                    pl.BlockSpec((1, H), lambda i: (0, 0)),
                    pl.BlockSpec((H, 1), lambda i: (0, 0)),
                    pl.BlockSpec((1, 1), lambda i: (0, 0)),
                ],
                out_specs=pl.BlockSpec((TR, F), lambda i: (i, 0)),
            ),
            compiler_params=cparams,
            cost_estimate=cost,
        )(mfcc2d, mel2d, w1a.astype(matmul_dtype), w1b.astype(matmul_dtype),
          b1.reshape(1, H), w2_diff.reshape(H, 1),
          jnp.full((1, 1), b2_diff, jnp.float32))

        out2d = out_full[:R] if R_pad != R else out_full

    return out2d.reshape(B, T, F)


# ----------------------------------------------------------------------------
# Pure-JAX reference + params
# ----------------------------------------------------------------------------
def feature_fusion_ref(mfcc, mel_spec, params):
    mfcc = mfcc.astype(jnp.float32)
    mel_spec = mel_spec.astype(jnp.float32)
    combined = jnp.concatenate((mfcc, mel_spec), axis=-1)
    h = jnp.maximum(combined @ params["w1"] + params["b1"], 0.0)
    logits = h @ params["w2"] + params["b2"]
    weights = jax.nn.softmax(logits, axis=-1)
    return mfcc * weights[..., 0:1] + mel_spec * weights[..., 1:2]


def init_params(key, n_mfcc, n_mels, hidden=_HIDDEN):
    k1, k2, k3, k4 = jax.random.split(key, 4)
    d_in = n_mfcc + n_mels
    bound1 = 1.0 / float(jnp.sqrt(d_in))
    bound2 = 1.0 / float(jnp.sqrt(hidden))
    return {
        "w1": jax.random.uniform(k1, (d_in, hidden), jnp.float32, -bound1, bound1),
        "b1": jax.random.uniform(k2, (hidden,), jnp.float32, -bound1, bound1),
        "w2": jax.random.uniform(k3, (hidden, 2), jnp.float32, -bound2, bound2),
        "b2": jax.random.uniform(k4, (2,), jnp.float32, -bound2, bound2),
    }


if __name__ == "__main__":
    key = jax.random.PRNGKey(0)
    kp, k1, k2, kp2, k3, k4, kp3, k5, k6 = jax.random.split(key, 9)

    # 1) Lane-packed path, exact f32 check (multi-step grid, no padding).
    B, T, F = 2, 64, 16
    params = init_params(kp, F, F)
    mfcc = jax.random.normal(k1, (B, T, F), jnp.float32)
    mel = jax.random.normal(k2, (B, T, F), jnp.float32)
    ref = feature_fusion_ref(mfcc, mel, params)
    out = jax.block_until_ready(
        feature_fusion(mfcc, mel, params, matmul_dtype=jnp.float32))
    assert out.shape == (B, T, F) and out.dtype == jnp.float32
    assert jnp.allclose(out, ref, atol=1e-5, rtol=1e-5), "packed f32 mismatch"

    # 2) Default bf16 matmul operands (single MXU pass), f32 I/O.
    out_bf = jax.block_until_ready(feature_fusion(mfcc, mel, params))
    assert jnp.max(jnp.abs(out_bf - ref)) < 1e-1, "packed bf16-matmul mismatch"

    # 3) bf16 I/O fast path (half the HBM bytes).
    mfcc16 = mfcc.astype(jnp.bfloat16)
    mel16 = mel.astype(jnp.bfloat16)
    ref16 = feature_fusion_ref(mfcc16, mel16, params)
    out16 = jax.block_until_ready(feature_fusion(mfcc16, mel16, params))
    assert out16.dtype == jnp.bfloat16
    assert jnp.max(jnp.abs(out16.astype(jnp.float32) - ref16)) < 1.5e-1, "bf16 I/O mismatch"

    # 4) Ragged rows + F that does not divide 128 (13 -> 16 lane pad).
    B2, T2, F2 = 2, 10, 13
    params2 = init_params(kp2, F2, F2)
    mfcc2 = jax.random.normal(k3, (B2, T2, F2), jnp.float32)
    mel2 = jax.random.normal(k4, (B2, T2, F2), jnp.float32)
    out2 = jax.block_until_ready(
        feature_fusion(mfcc2, mel2, params2, matmul_dtype=jnp.float32))
    ref2 = feature_fusion_ref(mfcc2, mel2, params2)
    assert out2.shape == (B2, T2, F2)
    assert jnp.allclose(out2, ref2, atol=1e-5, rtol=1e-5), "lane-pad path mismatch"

    # 5) F > 128 row-major path.
    B3, T3, F3 = 2, 16, 160
    params3 = init_params(kp3, F3, F3)
    mfcc3 = jax.random.normal(k5, (B3, T3, F3), jnp.float32)
    mel3 = jax.random.normal(k6, (B3, T3, F3), jnp.float32)
    out3 = jax.block_until_ready(
        feature_fusion(mfcc3, mel3, params3, matmul_dtype=jnp.float32))
    ref3 = feature_fusion_ref(mfcc3, mel3, params3)
    assert out3.shape == (B3, T3, F3)
    assert jnp.allclose(out3, ref3, atol=1e-5, rtol=1e-5), "row path mismatch"

    print("KERNEL_OK")
</pallas_src>

<mosaic_0001>
module attributes {stable_mosaic.version = 11 : i64} {
  func.func @_fusion_kernel_packed(%arg0: i32, %arg1: memref<8x128xf32, #tpu.memory_space<vmem>>, %arg2: memref<8x128xf32, #tpu.memory_space<vmem>>, %arg3: memref<128x512xf32, #tpu.memory_space<vmem>>, %arg4: memref<128x512xf32, #tpu.memory_space<vmem>>, %arg5: memref<1x512xf32, #tpu.memory_space<vmem>>, %arg6: memref<512x8xf32, #tpu.memory_space<vmem>>, %arg7: memref<1x8xf32, #tpu.memory_space<vmem>>, %arg8: memref<8x128xf32, #tpu.memory_space<vmem>>, %arg9: memref<8x128xf32, #tpu.memory_space<vmem>>) attributes {dimension_semantics = [#tpu.dimension_semantics<parallel>], iteration_bounds = array<i64: 2>, scalar_prefetch = 0 : i64, scratch_operands = 0 : i64, tpu.core_type = #tpu.core_type<tc>, window_params = [{transform_indices = @transform_0, window_bounds = array<i64: 8, 128>}, {transform_indices = @transform_1, window_bounds = array<i64: 8, 128>}, {pipeline_mode = #tpu.pipeline_mode<synchronous>, transform_indices = @transform_2, window_bounds = array<i64: 128, 512>}, {pipeline_mode = #tpu.pipeline_mode<synchronous>, transform_indices = @transform_3, window_bounds = array<i64: 128, 512>}, {pipeline_mode = #tpu.pipeline_mode<synchronous>, transform_indices = @transform_4, window_bounds = array<i64: 1, 512>}, {pipeline_mode = #tpu.pipeline_mode<synchronous>, transform_indices = @transform_5, window_bounds = array<i64: 512, 8>}, {pipeline_mode = #tpu.pipeline_mode<synchronous>, transform_indices = @transform_6, window_bounds = array<i64: 1, 8>}, {pipeline_mode = #tpu.pipeline_mode<synchronous>, transform_indices = @transform_7, window_bounds = array<i64: 8, 128>}, {transform_indices = @transform_8, window_bounds = array<i64: 8, 128>}]} {
    %c0 = arith.constant 0 : index
    %c0_0 = arith.constant 0 : index
    %0 = vector.load %arg1[%c0, %c0_0] : memref<8x128xf32, #tpu.memory_space<vmem>>, vector<8x128xf32>
    %c0_1 = arith.constant 0 : index
    %c0_2 = arith.constant 0 : index
    %1 = vector.load %arg2[%c0_1, %c0_2] : memref<8x128xf32, #tpu.memory_space<vmem>>, vector<8x128xf32>
    %c0_3 = arith.constant 0 : index
    %c0_4 = arith.constant 0 : index
    %2 = vector.load %arg3[%c0_3, %c0_4] : memref<128x512xf32, #tpu.memory_space<vmem>>, vector<128x512xf32>
    %cst = arith.constant dense<0.000000e+00> : vector<8x512xf32>
    %3 = tpu.matmul %0, %2, %cst {dimension_numbers = #tpu.dot_dimension_numbers<[1], [0], [0], [1], [0, 0, 1, 1], [], []>} : vector<8x128xf32>, vector<128x512xf32>, vector<8x512xf32> -> vector<8x512xf32>
    %c0_5 = arith.constant 0 : index
    %c0_6 = arith.constant 0 : index
    %4 = vector.load %arg4[%c0_5, %c0_6] : memref<128x512xf32, #tpu.memory_space<vmem>>, vector<128x512xf32>
    %cst_7 = arith.constant dense<0.000000e+00> : vector<8x512xf32>
    %5 = tpu.matmul %1, %4, %cst_7 {dimension_numbers = #tpu.dot_dimension_numbers<[1], [0], [0], [1], [0, 0, 1, 1], [], []>} : vector<8x128xf32>, vector<128x512xf32>, vector<8x512xf32> -> vector<8x512xf32>
    %6 = arith.addf %3, %5 : vector<8x512xf32>
    %c0_8 = arith.constant 0 : index
    %c0_9 = arith.constant 0 : index
    %7 = vector.load %arg5[%c0_8, %c0_9] : memref<1x512xf32, #tpu.memory_space<vmem>>, vector<1x512xf32>
    %8 = vector.broadcast %7 : vector<1x512xf32> to vector<8x512xf32>
    %9 = arith.addf %6, %8 : vector<8x512xf32>
    %cst_10 = arith.constant 0.000000e+00 : f32
    %10 = vector.broadcast %cst_10 : f32 to vector<8x512xf32>
    %11 = arith.maximumf %9, %10 : vector<8x512xf32>
    %c0_11 = arith.constant 0 : index
    %c0_12 = arith.constant 0 : index
    %12 = vector.load %arg6[%c0_11, %c0_12] : memref<512x8xf32, #tpu.memory_space<vmem>>, vector<512x8xf32>
    %cst_13 = arith.constant dense<0.000000e+00> : vector<8x8xf32>
    %13 = tpu.matmul %11, %12, %cst_13 {dimension_numbers = #tpu.dot_dimension_numbers<[1], [0], [0], [1], [0, 0, 1, 1], [], []>} : vector<8x512xf32>, vector<512x8xf32>, vector<8x8xf32> -> vector<8x8xf32>
    %c0_14 = arith.constant 0 : index
    %c0_15 = arith.constant 0 : index
    %14 = vector.load %arg7[%c0_14, %c0_15] : memref<1x8xf32, #tpu.memory_space<vmem>>, vector<1x8xf32>
    %15 = vector.broadcast %14 : vector<1x8xf32> to vector<8x8xf32>
    %16 = arith.addf %13, %15 : vector<8x8xf32>
    %cst_16 = arith.constant 0.000000e+00 : f32
    %17 = vector.broadcast %cst_16 : f32 to vector<8x8xf32>
    %18 = arith.subf %17, %16 : vector<8x8xf32>
    %19 = math.exp %18 : vector<8x8xf32>
    %cst_17 = arith.constant 1.000000e+00 : f32
    %20 = vector.broadcast %cst_17 : f32 to vector<8x8xf32>
    %21 = arith.addf %20, %19 : vector<8x8xf32>
    %cst_18 = arith.constant 1.000000e+00 : f32
    %22 = vector.broadcast %cst_18 : f32 to vector<8x8xf32>
    %23 = arith.divf %22, %21 : vector<8x8xf32>
    %c0_19 = arith.constant 0 : index
    %c0_20 = arith.constant 0 : index
    %24 = vector.load %arg8[%c0_19, %c0_20] : memref<8x128xf32, #tpu.memory_space<vmem>>, vector<8x128xf32>
    %cst_21 = arith.constant dense<0.000000e+00> : vector<8x128xf32>
    %25 = tpu.matmul %23, %24, %cst_21 {dimension_numbers = #tpu.dot_dimension_numbers<[1], [0], [0], [1], [0, 0, 1, 1], [], []>} : vector<8x8xf32>, vector<8x128xf32>, vector<8x128xf32> -> vector<8x128xf32>
    %26 = arith.subf %0, %1 : vector<8x128xf32>
    %27 = arith.mulf %25, %26 : vector<8x128xf32>
    %28 = arith.addf %1, %27 : vector<8x128xf32>
    %c0_22 = arith.constant 0 : index
    %c0_23 = arith.constant 0 : index
    %29 = vector.load %arg9[%c0_22, %c0_23] : memref<8x128xf32, #tpu.memory_space<vmem>>, vector<8x128xf32>
    tpu.vector_store %arg9[%c0_22, %c0_23], %28 {strides = array<i32>} : memref<8x128xf32, #tpu.memory_space<vmem>>, vector<8x128xf32>,
    return
  }
  func.func @transform_0(%arg0: i32) -> (i32, i32) {
    %c0_i32 = arith.constant 0 : i32
    %c0_i32_0 = arith.constant 0 : i32
    return %arg0, %c0_i32 : i32, i32
  }
  func.func @transform_1(%arg0: i32) -> (i32, i32) {
    %c0_i32 = arith.constant 0 : i32
    %c0_i32_0 = arith.constant 0 : i32
    return %arg0, %c0_i32 : i32, i32
  }
  func.func @transform_2(%arg0: i32) -> (i32, i32) {
    %c0_i32 = arith.constant 0 : i32
    %c0_i32_0 = arith.constant 0 : i32
    %c0_i32_1 = arith.constant 0 : i32
    return %c0_i32, %c0_i32_0 : i32, i32
  }
  func.func @transform_3(%arg0: i32) -> (i32, i32) {
    %c0_i32 = arith.constant 0 : i32
    %c0_i32_0 = arith.constant 0 : i32
    %c0_i32_1 = arith.constant 0 : i32
    return %c0_i32, %c0_i32_0 : i32, i32
  }
  func.func @transform_4(%arg0: i32) -> (i32, i32) {
    %c0_i32 = arith.constant 0 : i32
    %c0_i32_0 = arith.constant 0 : i32
    %c0_i32_1 = arith.constant 0 : i32
    return %c0_i32, %c0_i32_0 : i32, i32
  }
  func.func @transform_5(%arg0: i32) -> (i32, i32) {
    %c0_i32 = arith.constant 0 : i32
    %c0_i32_0 = arith.constant 0 : i32
    %c0_i32_1 = arith.constant 0 : i32
    return %c0_i32, %c0_i32_0 : i32, i32
  }
  func.func @transform_6(%arg0: i32) -> (i32, i32) {
    %c0_i32 = arith.constant 0 : i32
    %c0_i32_0 = arith.constant 0 : i32
    %c0_i32_1 = arith.constant 0 : i32
    return %c0_i32, %c0_i32_0 : i32, i32
  }
  func.func @transform_7(%arg0: i32) -> (i32, i32) {
    %c0_i32 = arith.constant 0 : i32
    %c0_i32_0 = arith.constant 0 : i32
    %c0_i32_1 = arith.constant 0 : i32
    return %c0_i32, %c0_i32_0 : i32, i32
  }
  func.func @transform_8(%arg0: i32) -> (i32, i32) {
    %c0_i32 = arith.constant 0 : i32
    %c0_i32_0 = arith.constant 0 : i32
    return %arg0, %c0_i32 : i32, i32
  }
}

</mosaic_0001>

<llo_original>
// kernel: tpu_custom_call.1
$region0: #{tpu_custom_call.1}
  #allocation0 [shape = 'u32[]', space=smem, size = 0x4, offset = 0x4, fixed_abs, tag = 'smem constant byte address 0x4 - core index']
  #allocation1 [shape = 'u32[144,128]{1,0:T(1,128)}', space=vmem, size = 0x12000, scoped, tag = 'internal scratch']
  %s0 = inlined_call_operand.vmem [shape: f32[16,128], index: 0, kind: input, shape index: {}]
  %s1 = inlined_call_operand.vmem [shape: f32[16,128], index: 1, kind: input, shape index: {}]
  %s2 = inlined_call_operand.vmem [shape: f32[128,512], index: 2, kind: input, shape index: {}]
  %s3 = inlined_call_operand.hbm [shape: f32[128,512], index: 3, kind: input, shape index: {}]
  %s4 = inlined_call_operand.vmem [shape: f32[1,512], index: 4, kind: input, shape index: {}]
  %s5 = inlined_call_operand.vmem [shape: f32[512,8], index: 5, kind: input, shape index: {}]
  %s6 = inlined_call_operand.vmem [shape: f32[1,8], index: 6, kind: input, shape index: {}]
  %s7 = inlined_call_operand.vmem [shape: f32[8,128], index: 7, kind: input, shape index: {}]
  %s8 = inlined_call_operand.hbm [shape: f32[16,128], index: 8, kind: output, shape index: {}]
  %s9 = sld [smem:[#allocation0]]
  $region69: #{tpu_custom_call.1} parent=0
    _
  %s11 = ssub.s32 1, %s9
  %s12 = scalar_select 0, %s11, %s9
  $region1: #{tpu_custom_call.1} parent=0
    #allocation2 [shape = 'u8[262144]{0}', space=vmem, size = 0x40000, scoped, tag = 'input window, operand 3, single buffered']
    #allocation3 [shape = 's32[2]{0}', space=sflag, size = 0x8, scoped, tag = 'scoped memory for tpu_custom_call.1']
    #allocation4 [shape = 's32[2]{0}', space=sflag, size = 0x8, scoped, tag = 'scoped memory for tpu_custom_call.1']
    #allocation5 [shape = 'u8[8192]{0}', space=vmem, size = 0x2000, scoped, tag = 'output window, operand 0']
    %13 = vsyncpa [#allocation3], 0
    %14 = vsyncpa [#allocation4], 0
    %s15 = scalar_lea.sflag [#allocation4], 1
    %16 = vsyncpa %s15, 0
    loop: start=0, step=1, limit=4
    $region2: #{tpu_custom_call.1} parent=1 // loop_pre_header
      _
    $region3: #{tpu_custom_call.1} parent=1 // loop_header
      %s18 = sphi 0, %s22
      %p19 = scmp.ge.s32.totalorder %s18, 4
      %s28 = sphi 0, %s30
      %s31 = sphi 0, %s28
      %s32 = sphi 0, %s31
      %s48 = sphi 0, %s32
      %s54 = sphi 0, %s56
      %s57 = sphi 0, %s54
      %s58 = sphi 0, %s57
      %s74 = sphi 0, %s58
      %s78 = sphi 0, %s78
      %s80 = sphi 0, %s78
      %s81 = sphi 0, %s80
      %s95 = sphi 0, %s81
      %s99 = sphi 0, %s99
      %s101 = sphi 0, %s99
      %s102 = sphi 0, %s101
      %s116 = sphi 0, %s102
      %s120 = sphi 0, %s120
      %s122 = sphi 0, %s120
      %s123 = sphi 0, %s122
      %s137 = sphi 0, %s123
      %s141 = sphi 0, %s141
      %s143 = sphi 0, %s141
      %s144 = sphi 0, %s143
      %s158 = sphi 0, %s144
      %s162 = sphi 0, %s162
      %s164 = sphi 0, %s162
      %s165 = sphi 0, %s164
      %s179 = sphi 0, %s165
      %s183 = sphi 0, %s183
      %s185 = sphi 0, %s183
      %s186 = sphi 0, %s185
      %s200 = sphi 0, %s186
      %s206 = sphi 0, %s208
      %s209 = sphi 0, %s206
      %s210 = sphi 0, %s209
      %s226 = sphi 0, %s210
    $region4: #{tpu_custom_call.1} parent=1 // loop_header_branch
      %21 = sbr.rel (%p19) target = $region8
    $region5: #{tpu_custom_call.1} parent=1 // loop_body
      %s23 = ssub.s32 %s18, 1
      %s24 = ssub.s32 %s18, 2
      %s25 = sadd.s32 %s18, 1
      %s26 = ssub.s32 %s18, %s25
      %p27 = scmp.eq.s32.totalorder %s26, 0
      %s29 = sadd.s32 %s28, 1
      %s30 = scalar_select %p27, %s28, %s29
      %p33 = pneg %p27
      %p34 = scmp.eq.s32.totalorder %s18, 1
      %p35 = por %p33, %p34
      %p36 = scmp.ne.s32.totalorder %s28, %s31
      %p37 = scmp.eq.s32.totalorder %s18, 0
      %p38 = por %p36, %p37
      %p39 = scmp.ne.s32.totalorder %s28, %s31
      %p40 = scmp.eq.s32.totalorder %s23, 1
      %p41 = por %p39, %p40
      %p42 = scmp.ne.s32.totalorder %s31, %s32
      %p43 = scmp.eq.s32.totalorder %s23, 0
      %p44 = por %p42, %p43
      %p45 = scmp.ne.s32.totalorder %s31, %s32
      %p46 = scmp.eq.s32.totalorder %s24, 1
      %p47 = por %p45, %p46
      %p49 = scmp.ne.s32.totalorder %s32, %s48
      %p50 = scmp.eq.s32.totalorder %s24, 0
      %p51 = por %p49, %p50
      %s52 = ssub.s32 %s18, %s25
      %p53 = scmp.eq.s32.totalorder %s52, 0
      %s55 = sadd.s32 %s54, 1
      %s56 = scalar_select %p53, %s54, %s55
      %p59 = pneg %p53
      %p60 = scmp.eq.s32.totalorder %s18, 1
      %p61 = por %p59, %p60
      %p62 = scmp.ne.s32.totalorder %s54, %s57
      %p63 = scmp.eq.s32.totalorder %s18, 0
      %p64 = por %p62, %p63
      %p65 = scmp.ne.s32.totalorder %s54, %s57
      %p66 = scmp.eq.s32.totalorder %s23, 1
      %p67 = por %p65, %p66
      %p68 = scmp.ne.s32.totalorder %s57, %s58
      %p69 = scmp.eq.s32.totalorder %s23, 0
      %p70 = por %p68, %p69
      %p71 = scmp.ne.s32.totalorder %s57, %s58
      %p72 = scmp.eq.s32.totalorder %s24, 1
      %p73 = por %p71, %p72
      %p75 = scmp.ne.s32.totalorder %s58, %s74
      %p76 = scmp.eq.s32.totalorder %s24, 0
      %p77 = por %p75, %p76
      %s79 = sadd.s32 %s78, 1
      %p82 = scmp.eq.s32.totalorder %s18, 1
      %p83 = scmp.ne.s32.totalorder %s78, %s80
      %p84 = scmp.eq.s32.totalorder %s18, 0
      %p85 = por %p83, %p84
      %p86 = scmp.ne.s32.totalorder %s78, %s80
      %p87 = scmp.eq.s32.totalorder %s23, 1
      %p88 = por %p86, %p87
      %p89 = scmp.ne.s32.totalorder %s80, %s81
      %p90 = scmp.eq.s32.totalorder %s23, 0
      %p91 = por %p89, %p90
      %p92 = scmp.ne.s32.totalorder %s80, %s81
      %p93 = scmp.eq.s32.totalorder %s24, 1
      %p94 = por %p92, %p93
      %p96 = scmp.ne.s32.totalorder %s81, %s95
      %p97 = scmp.eq.s32.totalorder %s24, 0
      %p98 = por %p96, %p97
      %s100 = sadd.s32 %s99, 1
      %p103 = scmp.eq.s32.totalorder %s18, 1
      %p104 = scmp.ne.s32.totalorder %s99, %s101
      %p105 = scmp.eq.s32.totalorder %s18, 0
      %p106 = por %p104, %p105
      %p107 = scmp.ne.s32.totalorder %s99, %s101
      %p108 = scmp.eq.s32.totalorder %s23, 1
      %p109 = por %p107, %p108
      %p110 = scmp.ne.s32.totalorder %s101, %s102
      %p111 = scmp.eq.s32.totalorder %s23, 0
      %p112 = por %p110, %p111
      %p113 = scmp.ne.s32.totalorder %s101, %s102
      %p114 = scmp.eq.s32.totalorder %s24, 1
      %p115 = por %p113, %p114
      %p117 = scmp.ne.s32.totalorder %s102, %s116
      %p118 = scmp.eq.s32.totalorder %s24, 0
      %p119 = por %p117, %p118
      %s121 = sadd.s32 %s120, 1
      %p124 = scmp.eq.s32.totalorder %s18, 1
      %p125 = scmp.ne.s32.totalorder %s120, %s122
      %p126 = scmp.eq.s32.totalorder %s18, 0
      %p127 = por %p125, %p126
      %p128 = scmp.ne.s32.totalorder %s120, %s122
      %p129 = scmp.eq.s32.totalorder %s23, 1
      %p130 = por %p128, %p129
      %p131 = scmp.ne.s32.totalorder %s122, %s123
      %p132 = scmp.eq.s32.totalorder %s23, 0
      %p133 = por %p131, %p132
      %p134 = scmp.ne.s32.totalorder %s122, %s123
      %p135 = scmp.eq.s32.totalorder %s24, 1
      %p136 = por %p134, %p135
      %p138 = scmp.ne.s32.totalorder %s123, %s137
      %p139 = scmp.eq.s32.totalorder %s24, 0
      %p140 = por %p138, %p139
      %s142 = sadd.s32 %s141, 1
      %p145 = scmp.eq.s32.totalorder %s18, 1
      %p146 = scmp.ne.s32.totalorder %s141, %s143
      %p147 = scmp.eq.s32.totalorder %s18, 0
      %p148 = por %p146, %p147
      %p149 = scmp.ne.s32.totalorder %s141, %s143
      %p150 = scmp.eq.s32.totalorder %s23, 1
      %p151 = por %p149, %p150
      %p152 = scmp.ne.s32.totalorder %s143, %s144
      %p153 = scmp.eq.s32.totalorder %s23, 0
      %p154 = por %p152, %p153
      %p155 = scmp.ne.s32.totalorder %s143, %s144
      %p156 = scmp.eq.s32.totalorder %s24, 1
      %p157 = por %p155, %p156
      %p159 = scmp.ne.s32.totalorder %s144, %s158
      %p160 = scmp.eq.s32.totalorder %s24, 0
      %p161 = por %p159, %p160
      %s163 = sadd.s32 %s162, 1
      %p166 = scmp.eq.s32.totalorder %s18, 1
      %p167 = scmp.ne.s32.totalorder %s162, %s164
      %p168 = scmp.eq.s32.totalorder %s18, 0
      %p169 = por %p167, %p168
      %p170 = scmp.ne.s32.totalorder %s162, %s164
      %p171 = scmp.eq.s32.totalorder %s23, 1
      %p172 = por %p170, %p171
      %p173 = scmp.ne.s32.totalorder %s164, %s165
      %p174 = scmp.eq.s32.totalorder %s23, 0
      %p175 = por %p173, %p174
      %p176 = scmp.ne.s32.totalorder %s164, %s165
      %p177 = scmp.eq.s32.totalorder %s24, 1
      %p178 = por %p176, %p177
      %p180 = scmp.ne.s32.totalorder %s165, %s179
      %p181 = scmp.eq.s32.totalorder %s24, 0
      %p182 = por %p180, %p181
      %s184 = sadd.s32 %s183, 1
      %p187 = scmp.eq.s32.totalorder %s18, 1
      %p188 = scmp.ne.s32.totalorder %s183, %s185
      %p189 = scmp.eq.s32.totalorder %s18, 0
      %p190 = por %p188, %p189
      %p191 = scmp.ne.s32.totalorder %s183, %s185
      %p192 = scmp.eq.s32.totalorder %s23, 1
      %p193 = por %p191, %p192
      %p194 = scmp.ne.s32.totalorder %s185, %s186
      %p195 = scmp.eq.s32.totalorder %s23, 0
      %p196 = por %p194, %p195
      %p197 = scmp.ne.s32.totalorder %s185, %s186
      %p198 = scmp.eq.s32.totalorder %s24, 1
      %p199 = por %p197, %p198
      %p201 = scmp.ne.s32.totalorder %s186, %s200
      %p202 = scmp.eq.s32.totalorder %s24, 0
      %p203 = por %p201, %p202
      %s204 = ssub.s32 %s18, %s25
      %p205 = scmp.eq.s32.totalorder %s204, 0
      %s207 = sadd.s32 %s206, 1
      %s208 = scalar_select %p205, %s206, %s207
      %p211 = pneg %p205
      %p212 = scmp.eq.s32.totalorder %s18, 1
      %p213 = por %p211, %p212
      %p214 = scmp.ne.s32.totalorder %s206, %s209
      %p215 = scmp.eq.s32.totalorder %s18, 0
      %p216 = por %p214, %p215
      %p217 = scmp.ne.s32.totalorder %s206, %s209
      %p218 = scmp.eq.s32.totalorder %s23, 1
      %p219 = por %p217, %p218
      %p220 = scmp.ne.s32.totalorder %s209, %s210
      %p221 = scmp.eq.s32.totalorder %s23, 0
      %p222 = por %p220, %p221
      %p223 = scmp.ne.s32.totalorder %s209, %s210
      %p224 = scmp.eq.s32.totalorder %s24, 1
      %p225 = por %p223, %p224
      %p227 = scmp.ne.s32.totalorder %s210, %s226
      %p228 = scmp.eq.s32.totalorder %s24, 0
      %p229 = por %p227, %p228
      %p230 = scmp.le.s32.totalorder 1, %s18
      %p231 = scmp.lt.s32.totalorder %s18, 3
      %p232 = pnand %p230, %p231
      %p233 = pneg %p232
      // Predicated region
      $region9: #{tpu_custom_call.1} parent=5 // pred_check
        _
      $region10: #{tpu_custom_call.1} parent=5 // pred_check_branch
        %235 = sbr.rel (%p232) target = $region12
      $region11: #{tpu_custom_call.1} parent=5 // pred_region
        %s236 = ssub.s32 %s18, 1
        // Predicated region
        $region13: #{tpu_custom_call.1} parent=11 // pred_check
          %p237 = pneg %p91
        $region14: #{tpu_custom_call.1} parent=11 // pred_check_branch
          %239 = sbr.rel (%p237) target = $region16
        $region15: #{tpu_custom_call.1} parent=11 // pred_region
          _
        $region16: #{tpu_custom_call.1} parent=11 // pred_fallthru
          _
        // Predicated region
        $region17: #{tpu_custom_call.1} parent=11 // pred_check
          %p240 = pneg %p112
        $region18: #{tpu_custom_call.1} parent=11 // pred_check_branch
          %242 = sbr.rel (%p240) target = $region20
        $region19: #{tpu_custom_call.1} parent=11 // pred_region
          %s244 = ssub.s32 8192, 8192
          %245 = vsyncadd [#allocation3], %s244
          %s246 = sshll.u32 [#allocation2], 4
          %s247 = int_to_ptr.vmem [resolvable:$true] %s246
          %252 = dma.hbm_to_vmem [thread:$0]  %s3, 8192, %s247, [#allocation3], 512, 512, 32
        $region20: #{tpu_custom_call.1} parent=11 // pred_fallthru
          _
        // Predicated region
        $region21: #{tpu_custom_call.1} parent=11 // pred_check
          %p253 = pneg %p133
        $region22: #{tpu_custom_call.1} parent=11 // pred_check_branch
          %255 = sbr.rel (%p253) target = $region24
        $region23: #{tpu_custom_call.1} parent=11 // pred_region
          _
        $region24: #{tpu_custom_call.1} parent=11 // pred_fallthru
          _
        // Predicated region
        $region25: #{tpu_custom_call.1} parent=11 // pred_check
          %p256 = pneg %p154
        $region26: #{tpu_custom_call.1} parent=11 // pred_check_branch
          %258 = sbr.rel (%p256) target = $region28
        $region27: #{tpu_custom_call.1} parent=11 // pred_region
          _
        $region28: #{tpu_custom_call.1} parent=11 // pred_fallthru
          _
        // Predicated region
        $region29: #{tpu_custom_call.1} parent=11 // pred_check
          %p259 = pneg %p175
        $region30: #{tpu_custom_call.1} parent=11 // pred_check_branch
          %261 = sbr.rel (%p259) target = $region32
        $region31: #{tpu_custom_call.1} parent=11 // pred_region
          _
        $region32: #{tpu_custom_call.1} parent=11 // pred_fallthru
          _
        // Predicated region
        $region33: #{tpu_custom_call.1} parent=11 // pred_check
          %p262 = pneg %p196
        $region34: #{tpu_custom_call.1} parent=11 // pred_check_branch
          %264 = sbr.rel (%p262) target = $region36
        $region35: #{tpu_custom_call.1} parent=11 // pred_region
          _
        $region36: #{tpu_custom_call.1} parent=11 // pred_fallthru
          _
      $region12: #{tpu_custom_call.1} parent=5 // pred_fallthru
        _
      %p265 = scmp.lt.s32.totalorder %s18, 2
      // Predicated region
      $region37: #{tpu_custom_call.1} parent=5 // pred_check
        %p266 = pneg %p265
      $region38: #{tpu_custom_call.1} parent=5 // pred_check_branch
        %268 = sbr.rel (%p266) target = $region40
      $region39: #{tpu_custom_call.1} parent=5 // pred_region
        // Predicated region
        $region41: #{tpu_custom_call.1} parent=39 // pred_check
          %p269 = pneg %p38
        $region42: #{tpu_custom_call.1} parent=39 // pred_check_branch
          %271 = sbr.rel (%p269) target = $region44
        $region43: #{tpu_custom_call.1} parent=39 // pred_region
          %p272 = scmp.lt.s32.totalorder %s18, 1
          %s273 = scalar_select %p272, %s18, 1
          %s274 = smul.addr %s273, 8
          %s275 = scalar_lea.vmem %s0, %s274
        $region44: #{tpu_custom_call.1} parent=39 // pred_fallthru
          _
        // Predicated region
        $region45: #{tpu_custom_call.1} parent=39 // pred_check
          %p276 = pneg %p64
        $region46: #{tpu_custom_call.1} parent=39 // pred_check_branch
          %278 = sbr.rel (%p276) target = $region48
        $region47: #{tpu_custom_call.1} parent=39 // pred_region
          %p279 = scmp.lt.s32.totalorder %s18, 1
          %s280 = scalar_select %p279, %s18, 1
          %s281 = smul.addr %s280, 8
          %s282 = scalar_lea.vmem %s1, %s281
        $region48: #{tpu_custom_call.1} parent=39 // pred_fallthru
          _
      $region40: #{tpu_custom_call.1} parent=5 // pred_fallthru
        _
      %p283 = scmp.le.s32.totalorder 1, %s18
      %p284 = scmp.lt.s32.totalorder %s18, 3
      %p285 = pnand %p283, %p284
      %p286 = pneg %p285
      // Predicated region
      $region49: #{tpu_custom_call.1} parent=5 // pred_check
        _
      $region50: #{tpu_custom_call.1} parent=5 // pred_check_branch
        %288 = sbr.rel (%p285) target = $region52
      $region51: #{tpu_custom_call.1} parent=5 // pred_region
        %s289 = ssub.s32 %s18, 1
        // Predicated region
        $region53: #{tpu_custom_call.1} parent=51 // pred_check
          %p290 = pneg %p112
        $region54: #{tpu_custom_call.1} parent=51 // pred_check_branch
          %292 = sbr.rel (%p290) target = $region56
        $region55: #{tpu_custom_call.1} parent=51 // pred_region
          %293 = dma.done [#allocation3], 8192
        $region56: #{tpu_custom_call.1} parent=51 // pred_fallthru
          _
        %p294 = scmp.lt.s32.totalorder %s23, 1
        %s295 = scalar_select %p294, %s23, 1
        %s296 = smul.addr %s295, 8
        %s297 = scalar_lea.vmem %s0, %s296
        %p298 = pneg %p44
        %p299 = pneg %p41
        %p300 = scmp.lt.s32.totalorder %s23, 1
        %s301 = scalar_select %p300, %s23, 1
        %s302 = smul.addr %s301, 8
        %s303 = scalar_lea.vmem %s1, %s302
        %p304 = pneg %p70
        %p305 = pneg %p67
        %p306 = pneg %p91
        %p307 = pneg %p88
        %p308 = pneg %p112
        %p309 = pneg %p109
        %p310 = pneg %p133
        %p311 = pneg %p130
        %p312 = pneg %p154
        %p313 = pneg %p151
        %p314 = pneg %p175
        %p315 = pneg %p172
        %p316 = pneg %p196
        %p317 = pneg %p193
        %p318 = pneg %p222
        %p319 = pneg %p219
        %s320 = sand.u32 %s209, 1
        %s321 = scalar_lea.sflag [#allocation4], %s320
        %s322 = sand.u32 %s209, 1
        %s323 = smul.addr %s322, 8
        %s324 = scalar_lea.vmem [#allocation5], %s323
        %p325 = scmp.lt.s32.totalorder %s23, 1
        %s326 = scalar_select %p325, %s23, 1
        %s327 = smul.addr %s326, 8
        %s328 = scalar_lea.vmem %s0, %s327
        %p329 = scmp.lt.s32.totalorder %s23, 1
        %s330 = scalar_select %p329, %s23, 1
        %s331 = smul.addr %s330, 8
        %s332 = scalar_lea.vmem %s1, %s331
        %v333 = vld [vmem:[%s328] sm:$0xff]
        %v334 = vld [vmem:[%s332] sm:$0xff]
        %v335 = vld [vmem:[%s2] sm:$0xff]
        %v336 = vld [vmem:[%s2 + $0x8] sm:$0xff]
        %v337 = vld [vmem:[%s2 + $0x10] sm:$0xff]
        %v338 = vld [vmem:[%s2 + $0x18] sm:$0xff]
        %v339 = vld [vmem:[%s2 + $0x20] sm:$0xff]
        %v340 = vld [vmem:[%s2 + $0x28] sm:$0xff]
        %v341 = vld [vmem:[%s2 + $0x30] sm:$0xff]
        %v342 = vld [vmem:[%s2 + $0x38] sm:$0xff]
        %v343 = vld [vmem:[%s2 + $0x40] sm:$0xff]
        %v344 = vld [vmem:[%s2 + $0x48] sm:$0xff]
        %v345 = vld [vmem:[%s2 + $0x50] sm:$0xff]
        %v346 = vld [vmem:[%s2 + $0x58] sm:$0xff]
        %v347 = vld [vmem:[%s2 + $0x60] sm:$0xff]
        %v348 = vld [vmem:[%s2 + $0x68] sm:$0xff]
        %v349 = vld [vmem:[%s2 + $0x70] sm:$0xff]
        %v350 = vld [vmem:[%s2 + $0x78] sm:$0xff]
        %v351 = vld [vmem:[%s2 + $0x80] sm:$0xff]
        %v352 = vld [vmem:[%s2 + $0x88] sm:$0xff]
        %v353 = vld [vmem:[%s2 + $0x90] sm:$0xff]
        %v354 = vld [vmem:[%s2 + $0x98] sm:$0xff]
        %v355 = vld [vmem:[%s2 + $0xa0] sm:$0xff]
        %v356 = vld [vmem:[%s2 + $0xa8] sm:$0xff]
        %v357 = vld [vmem:[%s2 + $0xb0] sm:$0xff]
        %v358 = vld [vmem:[%s2 + $0xb8] sm:$0xff]
        %v359 = vld [vmem:[%s2 + $0xc0] sm:$0xff]
        %v360 = vld [vmem:[%s2 + $0xc8] sm:$0xff]
        %v361 = vld [vmem:[%s2 + $0xd0] sm:$0xff]
        %v362 = vld [vmem:[%s2 + $0xd8] sm:$0xff]
        %v363 = vld [vmem:[%s2 + $0xe0] sm:$0xff]
        %v364 = vld [vmem:[%s2 + $0xe8] sm:$0xff]
        %v365 = vld [vmem:[%s2 + $0xf0] sm:$0xff]
        %v366 = vld [vmem:[%s2 + $0xf8] sm:$0xff]
        %v367 = vld [vmem:[%s2 + $0x100] sm:$0xff]
        %v368 = vld [vmem:[%s2 + $0x108] sm:$0xff]
        %v369 = vld [vmem:[%s2 + $0x110] sm:$0xff]
        %v370 = vld [vmem:[%s2 + $0x118] sm:$0xff]
        %v371 = vld [vmem:[%s2 + $0x120] sm:$0xff]
        %v372 = vld [vmem:[%s2 + $0x128] sm:$0xff]
        %v373 = vld [vmem:[%s2 + $0x130] sm:$0xff]
        %v374 = vld [vmem:[%s2 + $0x138] sm:$0xff]
        %v375 = vld [vmem:[%s2 + $0x140] sm:$0xff]
        %v376 = vld [vmem:[%s2 + $0x148] sm:$0xff]
        %v377 = vld [vmem:[%s2 + $0x150] sm:$0xff]
        %v378 = vld [vmem:[%s2 + $0x158] sm:$0xff]
        %v379 = vld [vmem:[%s2 + $0x160] sm:$0xff]
        %v380 = vld [vmem:[%s2 + $0x168] sm:$0xff]
        %v381 = vld [vmem:[%s2 + $0x170] sm:$0xff]
        %v382 = vld [vmem:[%s2 + $0x178] sm:$0xff]
        %v383 = vld [vmem:[%s2 + $0x180] sm:$0xff]
        %v384 = vld [vmem:[%s2 + $0x188] sm:$0xff]
        %v385 = vld [vmem:[%s2 + $0x190] sm:$0xff]
        %v386 = vld [vmem:[%s2 + $0x198] sm:$0xff]
        %v387 = vld [vmem:[%s2 + $0x1a0] sm:$0xff]
        %v388 = vld [vmem:[%s2 + $0x1a8] sm:$0xff]
        %v389 = vld [vmem:[%s2 + $0x1b0] sm:$0xff]
        %v390 = vld [vmem:[%s2 + $0x1b8] sm:$0xff]
        %v391 = vld [vmem:[%s2 + $0x1c0] sm:$0xff]
        %v392 = vld [vmem:[%s2 + $0x1c8] sm:$0xff]
        %v393 = vld [vmem:[%s2 + $0x1d0] sm:$0xff]
        %v394 = vld [vmem:[%s2 + $0x1d8] sm:$0xff]
        %v395 = vld [vmem:[%s2 + $0x1e0] sm:$0xff]
        %v396 = vld [vmem:[%s2 + $0x1e8] sm:$0xff]
        %v397 = vld [vmem:[%s2 + $0x1f0] sm:$0xff]
        %v398 = vld [vmem:[%s2 + $0x1f8] sm:$0xff]
        %v399 = vld [vmem:[#allocation2] sm:$0xff]
        %v400 = vld [vmem:[#allocation2 + $0x8] sm:$0xff]
        %v401 = vld [vmem:[#allocation2 + $0x10] sm:$0xff]
        %v402 = vld [vmem:[#allocation2 + $0x18] sm:$0xff]
        %v403 = vld [vmem:[#allocation2 + $0x20] sm:$0xff]
        %v404 = vld [vmem:[#allocation2 + $0x28] sm:$0xff]
        %v405 = vld [vmem:[#allocation2 + $0x30] sm:$0xff]
        %v406 = vld [vmem:[#allocation2 + $0x38] sm:$0xff]
        %v407 = vld [vmem:[#allocation2 + $0x40] sm:$0xff]
        %v408 = vld [vmem:[#allocation2 + $0x48] sm:$0xff]
        %v409 = vld [vmem:[#allocation2 + $0x50] sm:$0xff]
        %v410 = vld [vmem:[#allocation2 + $0x58] sm:$0xff]
        %v411 = vld [vmem:[#allocation2 + $0x60] sm:$0xff]
        %v412 = vld [vmem:[#allocation2 + $0x68] sm:$0xff]
        %v413 = vld [vmem:[#allocation2 + $0x70] sm:$0xff]
        %v414 = vld [vmem:[#allocation2 + $0x78] sm:$0xff]
        %v415 = vld [vmem:[#allocation2 + $0x80] sm:$0xff]
        %v416 = vld [vmem:[#allocation2 + $0x88] sm:$0xff]
        %v417 = vld [vmem:[#allocation2 + $0x90] sm:$0xff]
        %v418 = vld [vmem:[#allocation2 + $0x98] sm:$0xff]
        %v419 = vld [vmem:[#allocation2 + $0xa0] sm:$0xff]
        %v420 = vld [vmem:[#allocation2 + $0xa8] sm:$0xff]
        %v421 = vld [vmem:[#allocation2 + $0xb0] sm:$0xff]
        %v422 = vld [vmem:[#allocation2 + $0xb8] sm:$0xff]
        %v423 = vld [vmem:[#allocation2 + $0xc0] sm:$0xff]
        %v424 = vld [vmem:[#allocation2 + $0xc8] sm:$0xff]
        %v425 = vld [vmem:[#allocation2 + $0xd0] sm:$0xff]
        %v426 = vld [vmem:[#allocation2 + $0xd8] sm:$0xff]
        %v427 = vld [vmem:[#allocation2 + $0xe0] sm:$0xff]
        %v428 = vld [vmem:[#allocation2 + $0xe8] sm:$0xff]
        %v429 = vld [vmem:[#allocation2 + $0xf0] sm:$0xff]
        %v430 = vld [vmem:[#allocation2 + $0xf8] sm:$0xff]
        %v431 = vld [vmem:[#allocation2 + $0x100] sm:$0xff]
        %v432 = vld [vmem:[#allocation2 + $0x108] sm:$0xff]
        %v433 = vld [vmem:[#allocation2 + $0x110] sm:$0xff]
        %v434 = vld [vmem:[#allocation2 + $0x118] sm:$0xff]
        %v435 = vld [vmem:[#allocation2 + $0x120] sm:$0xff]
        %v436 = vld [vmem:[#allocation2 + $0x128] sm:$0xff]
        %v437 = vld [vmem:[#allocation2 + $0x130] sm:$0xff]
        %v438 = vld [vmem:[#allocation2 + $0x138] sm:$0xff]
        %v439 = vld [vmem:[#allocation2 + $0x140] sm:$0xff]
        %v440 = vld [vmem:[#allocation2 + $0x148] sm:$0xff]
        %v441 = vld [vmem:[#allocation2 + $0x150] sm:$0xff]
        %v442 = vld [vmem:[#allocation2 + $0x158] sm:$0xff]
        %v443 = vld [vmem:[#allocation2 + $0x160] sm:$0xff]
        %v444 = vld [vmem:[#allocation2 + $0x168] sm:$0xff]
        %v445 = vld [vmem:[#allocation2 + $0x170] sm:$0xff]
        %v446 = vld [vmem:[#allocation2 + $0x178] sm:$0xff]
        %v447 = vld [vmem:[#allocation2 + $0x180] sm:$0xff]
        %v448 = vld [vmem:[#allocation2 + $0x188] sm:$0xff]
        %v449 = vld [vmem:[#allocation2 + $0x190] sm:$0xff]
        %v450 = vld [vmem:[#allocation2 + $0x198] sm:$0xff]
        %v451 = vld [vmem:[#allocation2 + $0x1a0] sm:$0xff]
        %v452 = vld [vmem:[#allocation2 + $0x1a8] sm:$0xff]
        %v453 = vld [vmem:[#allocation2 + $0x1b0] sm:$0xff]
        %v454 = vld [vmem:[#allocation2 + $0x1b8] sm:$0xff]
        %v455 = vld [vmem:[#allocation2 + $0x1c0] sm:$0xff]
        %v456 = vld [vmem:[#allocation2 + $0x1c8] sm:$0xff]
        %v457 = vld [vmem:[#allocation2 + $0x1d0] sm:$0xff]
        %v458 = vld [vmem:[#allocation2 + $0x1d8] sm:$0xff]
        %v459 = vld [vmem:[#allocation2 + $0x1e0] sm:$0xff]
        %v460 = vld [vmem:[#allocation2 + $0x1e8] sm:$0xff]
        %v461 = vld [vmem:[#allocation2 + $0x1f0] sm:$0xff]
        %v462 = vld [vmem:[#allocation2 + $0x1f8] sm:$0xff]
        %463 = vmatprep.subr.mxu0 %v400
        %464 = vmatpush1.msra.mxu0 %v399
        %465 = vmatprep.subr.mxu0 %v404
        %466 = vmatpush1.msra.mxu0 %v403
        %467 = vmatprep.subr.mxu0 %v408
        %468 = vmatpush1.msra.mxu0 %v407
        %469 = vmatprep.subr.mxu0 %v412
        %470 = vmatpush1.msra.mxu0 %v411
        %471 = vmatprep.subr.mxu0 %v416
        %472 = vmatpush1.msra.mxu0 %v415
        %473 = vmatprep.subr.mxu0 %v420
        %474 = vmatpush1.msra.mxu0 %v419
        %475 = vmatprep.subr.mxu0 %v424
        %476 = vmatpush1.msra.mxu0 %v423
        %477 = vmatprep.subr.mxu0 %v428
        %478 = vmatpush1.msra.mxu0 %v427
        %479 = vmatprep.subr.mxu0 %v432
        %480 = vmatpush1.msra.mxu0 %v431
        %481 = vmatprep.subr.mxu0 %v436
        %482 = vmatpush1.msra.mxu0 %v435
        %483 = vmatprep.subr.mxu0 %v440
        %484 = vmatpush1.msra.mxu0 %v439
        %485 = vmatprep.subr.mxu0 %v444
        %486 = vmatpush1.msra.mxu0 %v443
        %487 = vmatprep.subr.mxu0 %v448
        %488 = vmatpush1.msra.mxu0 %v447
        %489 = vmatprep.subr.mxu0 %v452
        %490 = vmatpush1.msra.mxu0 %v451
        %491 = vmatprep.subr.mxu0 %v456
        %492 = vmatpush1.msra.mxu0 %v455
        %493 = vmatprep.subr.mxu0 %v460
        %494 = vmatpush1.msra.mxu0 %v459
        %495 = vmatprep.subr.mxu0 0.0
        %496 = vmatpush1.msra.mxu0 0.0
        %497 = vmatprep.subr.mxu0 0.0
        %498 = vmatpush1.msra.mxu0 0.0
        %499 = vmatprep.subr.mxu0 0.0
        %500 = vmatpush1.msra.mxu0 0.0
        %501 = vmatprep.subr.mxu0 0.0
        %502 = vmatpush1.msra.mxu0 0.0
        %503 = vmatprep.subr.mxu0 0.0
        %504 = vmatpush1.msra.mxu0 0.0
        %505 = vmatprep.subr.mxu0 0.0
        %506 = vmatpush1.msra.mxu0 0.0
        %507 = vmatprep.subr.mxu0 0.0
        %508 = vmatpush1.msra.mxu0 0.0
        %509 = vmatprep.subr.mxu0 0.0
        %510 = vmatpush1.msra.mxu0 0.0
        %511 = vmatprep.subr.mxu0 0.0
        %512 = vmatpush1.msra.mxu0 0.0
        %513 = vmatprep.subr.mxu0 0.0
        %514 = vmatpush1.msra.mxu0 0.0
        %515 = vmatprep.subr.mxu0 0.0
        %516 = vmatpush1.msra.mxu0 0.0
        %517 = vmatprep.subr.mxu0 0.0
        %518 = vmatpush1.msra.mxu0 0.0
        %519 = vmatprep.subr.mxu0 0.0
        %520 = vmatpush1.msra.mxu0 0.0
        %521 = vmatprep.subr.mxu0 0.0
        %522 = vmatpush1.msra.mxu0 0.0
        %523 = vmatprep.subr.mxu0 0.0
        %524 = vmatpush1.msra.mxu0 0.0
        %525 = vmatprep.subr.mxu0 0.0
        %526 = vmatpush1.msra.mxu0 0.0
        %527 = vmatprep.mubr.f32.mxu0 0.0
        %528 = vmatmul.mubr.f32.gmra.mrb[0].mxu0 %v334
        %v529 = vpop.f32.mrb[0].mxu0
        %v530 = vadd.f32 0.0, %v529
        %v531 = vpop.f32.mrb[0].mxu0
        %v532 = vadd.f32 0.0, %v531
        %533 = vdwg.mxu0
        %534 = vmatprep.subr.mxu0 %v402
        %535 = vmatpush1.msra.mxu0 %v401
        %536 = vmatprep.subr.mxu0 %v406
        %537 = vmatpush1.msra.mxu0 %v405
        %538 = vmatprep.subr.mxu0 %v410
        %539 = vmatpush1.msra.mxu0 %v409
        %540 = vmatprep.subr.mxu0 %v414
        %541 = vmatpush1.msra.mxu0 %v413
        %542 = vmatprep.subr.mxu0 %v418
        %543 = vmatpush1.msra.mxu0 %v417
        %544 = vmatprep.subr.mxu0 %v422
        %545 = vmatpush1.msra.mxu0 %v421
        %546 = vmatprep.subr.mxu0 %v426
        %547 = vmatpush1.msra.mxu0 %v425
        %548 = vmatprep.subr.mxu0 %v430
        %549 = vmatpush1.msra.mxu0 %v429
        %550 = vmatprep.subr.mxu0 %v434
        %551 = vmatpush1.msra.mxu0 %v433
        %552 = vmatprep.subr.mxu0 %v438
        %553 = vmatpush1.msra.mxu0 %v437
        %554 = vmatprep.subr.mxu0 %v442
        %555 = vmatpush1.msra.mxu0 %v441
        %556 = vmatprep.subr.mxu0 %v446
        %557 = vmatpush1.msra.mxu0 %v445
        %558 = vmatprep.subr.mxu0 %v450
        %559 = vmatpush1.msra.mxu0 %v449
        %560 = vmatprep.subr.mxu0 %v454
        %561 = vmatpush1.msra.mxu0 %v453
        %562 = vmatprep.subr.mxu0 %v458
        %563 = vmatpush1.msra.mxu0 %v457
        %564 = vmatprep.subr.mxu0 %v462
        %565 = vmatpush1.msra.mxu0 %v461
        %566 = vmatprep.subr.mxu0 0.0
        %567 = vmatpush1.msra.mxu0 0.0
        %568 = vmatprep.subr.mxu0 0.0
        %569 = vmatpush1.msra.mxu0 0.0
        %570 = vmatprep.subr.mxu0 0.0
        %571 = vmatpush1.msra.mxu0 0.0
        %572 = vmatprep.subr.mxu0 0.0
        %573 = vmatpush1.msra.mxu0 0.0
        %574 = vmatprep.subr.mxu0 0.0
        %575 = vmatpush1.msra.mxu0 0.0
        %576 = vmatprep.subr.mxu0 0.0
        %577 = vmatpush1.msra.mxu0 0.0
        %578 = vmatprep.subr.mxu0 0.0
        %579 = vmatpush1.msra.mxu0 0.0
        %580 = vmatprep.subr.mxu0 0.0
        %581 = vmatpush1.msra.mxu0 0.0
        %582 = vmatprep.subr.mxu0 0.0
        %583 = vmatpush1.msra.mxu0 0.0
        %584 = vmatprep.subr.mxu0 0.0
        %585 = vmatpush1.msra.mxu0 0.0
        %586 = vmatprep.subr.mxu0 0.0
        %587 = vmatpush1.msra.mxu0 0.0
        %588 = vmatprep.subr.mxu0 0.0
        %589 = vmatpush1.msra.mxu0 0.0
        %590 = vmatprep.subr.mxu0 0.0
        %591 = vmatpush1.msra.mxu0 0.0
        %592 = vmatprep.subr.mxu0 0.0
        %593 = vmatpush1.msra.mxu0 0.0
        %594 = vmatprep.subr.mxu0 0.0
        %595 = vmatpush1.msra.mxu0 0.0
        %596 = vmatprep.subr.mxu0 0.0
        %597 = vmatpush1.msra.mxu0 0.0
        %598 = vmatprep.mubr.f32.mxu0 0.0
        %599 = vmatmul.mubr.f32.gmra.mrb[0].mxu0 %v334
        %v600 = vpop.f32.mrb[0].mxu0
        %v601 = vadd.f32 0.0, %v600
        %v602 = vpop.f32.mrb[0].mxu0
        %v603 = vadd.f32 0.0, %v602
        %604 = vdwg.mxu0
        %605 = vmatprep.subr.mxu0 %v336
        %606 = vmatpush1.msra.mxu0 %v335
        %607 = vmatprep.subr.mxu0 %v340
        %608 = vmatpush1.msra.mxu0 %v339
        %609 = vmatprep.subr.mxu0 %v344
        %610 = vmatpush1.msra.mxu0 %v343
        %611 = vmatprep.subr.mxu0 %v348
        %612 = vmatpush1.msra.mxu0 %v347
        %613 = vmatprep.subr.mxu0 %v352
        %614 = vmatpush1.msra.mxu0 %v351
        %615 = vmatprep.subr.mxu0 %v356
        %616 = vmatpush1.msra.mxu0 %v355
        %617 = vmatprep.subr.mxu0 %v360
        %618 = vmatpush1.msra.mxu0 %v359
        %619 = vmatprep.subr.mxu0 %v364
        %620 = vmatpush1.msra.mxu0 %v363
        %621 = vmatprep.subr.mxu0 %v368
        %622 = vmatpush1.msra.mxu0 %v367
        %623 = vmatprep.subr.mxu0 %v372
        %624 = vmatpush1.msra.mxu0 %v371
        %625 = vmatprep.subr.mxu0 %v376
        %626 = vmatpush1.msra.mxu0 %v375
        %627 = vmatprep.subr.mxu0 %v380
        %628 = vmatpush1.msra.mxu0 %v379
        %629 = vmatprep.subr.mxu0 %v384
        %630 = vmatpush1.msra.mxu0 %v383
        %631 = vmatprep.subr.mxu0 %v388
        %632 = vmatpush1.msra.mxu0 %v387
        %633 = vmatprep.subr.mxu0 %v392
        %634 = vmatpush1.msra.mxu0 %v391
        %635 = vmatprep.subr.mxu0 %v396
        %636 = vmatpush1.msra.mxu0 %v395
        %637 = vmatprep.subr.mxu0 0.0
        %638 = vmatpush1.msra.mxu0 0.0
        %639 = vmatprep.subr.mxu0 0.0
        %640 = vmatpush1.msra.mxu0 0.0
        %641 = vmatprep.subr.mxu0 0.0
        %642 = vmatpush1.msra.mxu0 0.0
        %643 = vmatprep.subr.mxu0 0.0
        %644 = vmatpush1.msra.mxu0 0.0
        %645 = vmatprep.subr.mxu0 0.0
        %646 = vmatpush1.msra.mxu0 0.0
        %647 = vmatprep.subr.mxu0 0.0
        %648 = vmatpush1.msra.mxu0 0.0
        %649 = vmatprep.subr.mxu0 0.0
        %650 = vmatpush1.msra.mxu0 0.0
        %651 = vmatprep.subr.mxu0 0.0
        %652 = vmatpush1.msra.mxu0 0.0
        %653 = vmatprep.subr.mxu0 0.0
        %654 = vmatpush1.msra.mxu0 0.0
        %655 = vmatprep.subr.mxu0 0.0
        %656 = vmatpush1.msra.mxu0 0.0
        %657 = vmatprep.subr.mxu0 0.0
        %658 = vmatpush1.msra.mxu0 0.0
        %659 = vmatprep.subr.mxu0 0.0
        %660 = vmatpush1.msra.mxu0 0.0
        %661 = vmatprep.subr.mxu0 0.0
        %662 = vmatpush1.msra.mxu0 0.0
        %663 = vmatprep.subr.mxu0 0.0
        %664 = vmatpush1.msra.mxu0 0.0
        %665 = vmatprep.subr.mxu0 0.0
        %666 = vmatpush1.msra.mxu0 0.0
        %667 = vmatprep.subr.mxu0 0.0
        %668 = vmatpush1.msra.mxu0 0.0
        %669 = vmatprep.mubr.f32.mxu0 0.0
        %670 = vmatmul.mubr.f32.gmra.mrb[0].mxu0 %v333
        %v671 = vpop.f32.mrb[0].mxu0
        %v672 = vadd.f32 %v530, %v671
        %v673 = vpop.f32.mrb[0].mxu0
        %v674 = vadd.f32 %v532, %v673
        %675 = vdwg.mxu0
        %676 = vmatprep.subr.mxu0 %v338
        %677 = vmatpush1.msra.mxu0 %v337
        %678 = vmatprep.subr.mxu0 %v342
        %679 = vmatpush1.msra.mxu0 %v341
        %680 = vmatprep.subr.mxu0 %v346
        %681 = vmatpush1.msra.mxu0 %v345
        %682 = vmatprep.subr.mxu0 %v350
        %683 = vmatpush1.msra.mxu0 %v349
        %684 = vmatprep.subr.mxu0 %v354
        %685 = vmatpush1.msra.mxu0 %v353
        %686 = vmatprep.subr.mxu0 %v358
        %687 = vmatpush1.msra.mxu0 %v357
        %688 = vmatprep.subr.mxu0 %v362
        %689 = vmatpush1.msra.mxu0 %v361
        %690 = vmatprep.subr.mxu0 %v366
        %691 = vmatpush1.msra.mxu0 %v365
        %692 = vmatprep.subr.mxu0 %v370
        %693 = vmatpush1.msra.mxu0 %v369
        %694 = vmatprep.subr.mxu0 %v374
        %695 = vmatpush1.msra.mxu0 %v373
        %696 = vmatprep.subr.mxu0 %v378
        %697 = vmatpush1.msra.mxu0 %v377
        %698 = vmatprep.subr.mxu0 %v382
        %699 = vmatpush1.msra.mxu0 %v381
        %700 = vmatprep.subr.mxu0 %v386
        %701 = vmatpush1.msra.mxu0 %v385
        %702 = vmatprep.subr.mxu0 %v390
        %703 = vmatpush1.msra.mxu0 %v389
        %704 = vmatprep.subr.mxu0 %v394
        %705 = vmatpush1.msra.mxu0 %v393
        %706 = vmatprep.subr.mxu0 %v398
        %707 = vmatpush1.msra.mxu0 %v397
        %708 = vmatprep.subr.mxu0 0.0
        %709 = vmatpush1.msra.mxu0 0.0
        %710 = vmatprep.subr.mxu0 0.0
        %711 = vmatpush1.msra.mxu0 0.0
        %712 = vmatprep.subr.mxu0 0.0
        %713 = vmatpush1.msra.mxu0 0.0
        %714 = vmatprep.subr.mxu0 0.0
        %715 = vmatpush1.msra.mxu0 0.0
        %716 = vmatprep.subr.mxu0 0.0
        %717 = vmatpush1.msra.mxu0 0.0
        %718 = vmatprep.subr.mxu0 0.0
        %719 = vmatpush1.msra.mxu0 0.0
        %720 = vmatprep.subr.mxu0 0.0
        %721 = vmatpush1.msra.mxu0 0.0
        %722 = vmatprep.subr.mxu0 0.0
        %723 = vmatpush1.msra.mxu0 0.0
        %724 = vmatprep.subr.mxu0 0.0
        %725 = vmatpush1.msra.mxu0 0.0
        %726 = vmatprep.subr.mxu0 0.0
        %727 = vmatpush1.msra.mxu0 0.0
        %728 = vmatprep.subr.mxu0 0.0
        %729 = vmatpush1.msra.mxu0 0.0
        %730 = vmatprep.subr.mxu0 0.0
        %731 = vmatpush1.msra.mxu0 0.0
        %732 = vmatprep.subr.mxu0 0.0
        %733 = vmatpush1.msra.mxu0 0.0
        %734 = vmatprep.subr.mxu0 0.0
        %735 = vmatpush1.msra.mxu0 0.0
        %736 = vmatprep.subr.mxu0 0.0
        %737 = vmatpush1.msra.mxu0 0.0
        %738 = vmatprep.subr.mxu0 0.0
        %739 = vmatpush1.msra.mxu0 0.0
        %740 = vmatprep.mubr.f32.mxu0 0.0
        %741 = vmatmul.mubr.f32.gmra.mrb[0].mxu0 %v333
        %v742 = vpop.f32.mrb[0].mxu0
        %v743 = vadd.f32 %v601, %v742
        %v744 = vpop.f32.mrb[0].mxu0
        %v745 = vadd.f32 %v603, %v744
        %746 = vdwg.mxu0
        %v747 = vld [vmem:[%s4] sm:$0xf]
        %v749 = vlaneseq
        %v750 = vshrl.u32 %v749, 7
        %v751 = vsub.s32 0, %v750
        %v752 = vrot.slane %v747, %v751
        %v753 = vlaneseq
        %v754 = vshrl.u32 %v753, 7
        %v755 = vsub.s32 1, %v754
        %v756 = vrot.slane %v747, %v755
        %v757 = vlaneseq
        %v758 = vshrl.u32 %v757, 7
        %v759 = vsub.s32 2, %v758
        %v760 = vrot.slane %v747, %v759
        %v761 = vlaneseq
        %v762 = vshrl.u32 %v761, 7
        %v763 = vsub.s32 3, %v762
        %v764 = vrot.slane %v747, %v763
        %v769 = vadd.f32 %v672, %v752
        %v770 = vadd.f32 %v674, %v756
        %v771 = vadd.f32 %v743, %v760
        %v772 = vadd.f32 %v745, %v764
        %v773 = vmax.f32 %v769, 0.0
        %v774 = vmax.f32 %v770, 0.0
        %v775 = vmax.f32 %v771, 0.0
        %v776 = vmax.f32 %v772, 0.0
        %v777 = vld [vmem:[%s5] sm:$0xff]
        %v778 = vld [vmem:[%s5 + $0x8] sm:$0xff]
        %v779 = vld [vmem:[%s5 + $0x10] sm:$0xff]
        %v780 = vld [vmem:[%s5 + $0x18] sm:$0xff]
        %v781 = vld [vmem:[%s5 + $0x20] sm:$0xff]
        %v782 = vld [vmem:[%s5 + $0x28] sm:$0xff]
        %v783 = vld [vmem:[%s5 + $0x30] sm:$0xff]
        %v784 = vld [vmem:[%s5 + $0x38] sm:$0xff]
        %v785 = vld [vmem:[%s5 + $0x40] sm:$0xff]
        %v786 = vld [vmem:[%s5 + $0x48] sm:$0xff]
        %v787 = vld [vmem:[%s5 + $0x50] sm:$0xff]
        %v788 = vld [vmem:[%s5 + $0x58] sm:$0xff]
        %v789 = vld [vmem:[%s5 + $0x60] sm:$0xff]
        %v790 = vld [vmem:[%s5 + $0x68] sm:$0xff]
        %v791 = vld [vmem:[%s5 + $0x70] sm:$0xff]
        %v792 = vld [vmem:[%s5 + $0x78] sm:$0xff]
        %v793 = vld [vmem:[%s5 + $0x80] sm:$0xff]
        %v794 = vld [vmem:[%s5 + $0x88] sm:$0xff]
        %v795 = vld [vmem:[%s5 + $0x90] sm:$0xff]
        %v796 = vld [vmem:[%s5 + $0x98] sm:$0xff]
        %v797 = vld [vmem:[%s5 + $0xa0] sm:$0xff]
        %v798 = vld [vmem:[%s5 + $0xa8] sm:$0xff]
        %v799 = vld [vmem:[%s5 + $0xb0] sm:$0xff]
        %v800 = vld [vmem:[%s5 + $0xb8] sm:$0xff]
        %v801 = vld [vmem:[%s5 + $0xc0] sm:$0xff]
        %v802 = vld [vmem:[%s5 + $0xc8] sm:$0xff]
        %v803 = vld [vmem:[%s5 + $0xd0] sm:$0xff]
        %v804 = vld [vmem:[%s5 + $0xd8] sm:$0xff]
        %v805 = vld [vmem:[%s5 + $0xe0] sm:$0xff]
        %v806 = vld [vmem:[%s5 + $0xe8] sm:$0xff]
        %v807 = vld [vmem:[%s5 + $0xf0] sm:$0xff]
        %v808 = vld [vmem:[%s5 + $0xf8] sm:$0xff]
        %v809 = vld [vmem:[%s5 + $0x100] sm:$0xff]
        %v810 = vld [vmem:[%s5 + $0x108] sm:$0xff]
        %v811 = vld [vmem:[%s5 + $0x110] sm:$0xff]
        %v812 = vld [vmem:[%s5 + $0x118] sm:$0xff]
        %v813 = vld [vmem:[%s5 + $0x120] sm:$0xff]
        %v814 = vld [vmem:[%s5 + $0x128] sm:$0xff]
        %v815 = vld [vmem:[%s5 + $0x130] sm:$0xff]
        %v816 = vld [vmem:[%s5 + $0x138] sm:$0xff]
        %v817 = vld [vmem:[%s5 + $0x140] sm:$0xff]
        %v818 = vld [vmem:[%s5 + $0x148] sm:$0xff]
        %v819 = vld [vmem:[%s5 + $0x150] sm:$0xff]
        %v820 = vld [vmem:[%s5 + $0x158] sm:$0xff]
        %v821 = vld [vmem:[%s5 + $0x160] sm:$0xff]
        %v822 = vld [vmem:[%s5 + $0x168] sm:$0xff]
        %v823 = vld [vmem:[%s5 + $0x170] sm:$0xff]
        %v824 = vld [vmem:[%s5 + $0x178] sm:$0xff]
        %v825 = vld [vmem:[%s5 + $0x180] sm:$0xff]
        %v826 = vld [vmem:[%s5 + $0x188] sm:$0xff]
        %v827 = vld [vmem:[%s5 + $0x190] sm:$0xff]
        %v828 = vld [vmem:[%s5 + $0x198] sm:$0xff]
        %v829 = vld [vmem:[%s5 + $0x1a0] sm:$0xff]
        %v830 = vld [vmem:[%s5 + $0x1a8] sm:$0xff]
        %v831 = vld [vmem:[%s5 + $0x1b0] sm:$0xff]
        %v832 = vld [vmem:[%s5 + $0x1b8] sm:$0xff]
        %v833 = vld [vmem:[%s5 + $0x1c0] sm:$0xff]
        %v834 = vld [vmem:[%s5 + $0x1c8] sm:$0xff]
        %v835 = vld [vmem:[%s5 + $0x1d0] sm:$0xff]
        %v836 = vld [vmem:[%s5 + $0x1d8] sm:$0xff]
        %v837 = vld [vmem:[%s5 + $0x1e0] sm:$0xff]
        %v838 = vld [vmem:[%s5 + $0x1e8] sm:$0xff]
        %v839 = vld [vmem:[%s5 + $0x1f0] sm:$0xff]
        %v840 = vld [vmem:[%s5 + $0x1f8] sm:$0xff]
        %v841 = vld [vmem:[%s6] sm:$0x1]
        %v843 = vlaneseq
        %v844 = vshrl.u32 %v843, 7
        %v845 = vsub.s32 0, %v844
        %v846 = vrot.slane %v841, %v845
        %848 = vmatprep.subr.mxu0 0.0
        %849 = vmatpush1.msra.mxu0 %v777
        %850 = vmatprep.subr.mxu0 0.0
        %851 = vmatpush1.msra.mxu0 %v778
        %852 = vmatprep.subr.mxu0 0.0
        %853 = vmatpush1.msra.mxu0 %v779
        %854 = vmatprep.subr.mxu0 0.0
        %855 = vmatpush1.msra.mxu0 %v780
        %856 = vmatprep.subr.mxu0 0.0
        %857 = vmatpush1.msra.mxu0 %v781
        %858 = vmatprep.subr.mxu0 0.0
        %859 = vmatpush1.msra.mxu0 %v782
        %860 = vmatprep.subr.mxu0 0.0
        %861 = vmatpush1.msra.mxu0 %v783
        %862 = vmatprep.subr.mxu0 0.0
        %863 = vmatpush1.msra.mxu0 %v784
        %864 = vmatprep.subr.mxu0 0.0
        %865 = vmatpush1.msra.mxu0 %v785
        %866 = vmatprep.subr.mxu0 0.0
        %867 = vmatpush1.msra.mxu0 %v786
        %868 = vmatprep.subr.mxu0 0.0
        %869 = vmatpush1.msra.mxu0 %v787
        %870 = vmatprep.subr.mxu0 0.0
        %871 = vmatpush1.msra.mxu0 %v788
        %872 = vmatprep.subr.mxu0 0.0
        %873 = vmatpush1.msra.mxu0 %v789
        %874 = vmatprep.subr.mxu0 0.0
        %875 = vmatpush1.msra.mxu0 %v790
        %876 = vmatprep.subr.mxu0 0.0
        %877 = vmatpush1.msra.mxu0 %v791
        %878 = vmatprep.subr.mxu0 0.0
        %879 = vmatpush1.msra.mxu0 %v792
        %880 = vmatprep.subr.mxu0 0.0
        %881 = vmatpush1.msra.mxu0 %v793
        %882 = vmatprep.subr.mxu0 0.0
        %883 = vmatpush1.msra.mxu0 %v794
        %884 = vmatprep.subr.mxu0 0.0
        %885 = vmatpush1.msra.mxu0 %v795
        %886 = vmatprep.subr.mxu0 0.0
        %887 = vmatpush1.msra.mxu0 %v796
        %888 = vmatprep.subr.mxu0 0.0
        %889 = vmatpush1.msra.mxu0 %v797
        %890 = vmatprep.subr.mxu0 0.0
        %891 = vmatpush1.msra.mxu0 %v798
        %892 = vmatprep.subr.mxu0 0.0
        %893 = vmatpush1.msra.mxu0 %v799
        %894 = vmatprep.subr.mxu0 0.0
        %895 = vmatpush1.msra.mxu0 %v800
        %896 = vmatprep.subr.mxu0 0.0
        %897 = vmatpush1.msra.mxu0 %v801
        %898 = vmatprep.subr.mxu0 0.0
        %899 = vmatpush1.msra.mxu0 %v802
        %900 = vmatprep.subr.mxu0 0.0
        %901 = vmatpush1.msra.mxu0 %v803
        %902 = vmatprep.subr.mxu0 0.0
        %903 = vmatpush1.msra.mxu0 %v804
        %904 = vmatprep.subr.mxu0 0.0
        %905 = vmatpush1.msra.mxu0 %v805
        %906 = vmatprep.subr.mxu0 0.0
        %907 = vmatpush1.msra.mxu0 %v806
        %908 = vmatprep.subr.mxu0 0.0
        %909 = vmatpush1.msra.mxu0 %v807
        %910 = vmatprep.subr.mxu0 0.0
        %911 = vmatpush1.msra.mxu0 %v808
        %912 = vmatprep.mubr.f32.mxu0 %v774
        %913 = vmatmul.mubr.f32.gmra.mrb[0].mxu0 %v773
        %v914 = vpop.f32.mrb[0].mxu0
        %v915 = vadd.f32 %v846, %v914
        %v916 = vpop.f32.mrb[0].mxu0
        %917 = vdwg.mxu0
        %918 = vmatprep.subr.mxu0 0.0
        %919 = vmatpush1.msra.mxu0 %v809
        %920 = vmatprep.subr.mxu0 0.0
        %921 = vmatpush1.msra.mxu0 %v810
        %922 = vmatprep.subr.mxu0 0.0
        %923 = vmatpush1.msra.mxu0 %v811
        %924 = vmatprep.subr.mxu0 0.0
        %925 = vmatpush1.msra.mxu0 %v812
        %926 = vmatprep.subr.mxu0 0.0
        %927 = vmatpush1.msra.mxu0 %v813
        %928 = vmatprep.subr.mxu0 0.0
        %929 = vmatpush1.msra.mxu0 %v814
        %930 = vmatprep.subr.mxu0 0.0
        %931 = vmatpush1.msra.mxu0 %v815
        %932 = vmatprep.subr.mxu0 0.0
        %933 = vmatpush1.msra.mxu0 %v816
        %934 = vmatprep.subr.mxu0 0.0
        %935 = vmatpush1.msra.mxu0 %v817
        %936 = vmatprep.subr.mxu0 0.0
        %937 = vmatpush1.msra.mxu0 %v818
        %938 = vmatprep.subr.mxu0 0.0
        %939 = vmatpush1.msra.mxu0 %v819
        %940 = vmatprep.subr.mxu0 0.0
        %941 = vmatpush1.msra.mxu0 %v820
        %942 = vmatprep.subr.mxu0 0.0
        %943 = vmatpush1.msra.mxu0 %v821
        %944 = vmatprep.subr.mxu0 0.0
        %945 = vmatpush1.msra.mxu0 %v822
        %946 = vmatprep.subr.mxu0 0.0
        %947 = vmatpush1.msra.mxu0 %v823
        %948 = vmatprep.subr.mxu0 0.0
        %949 = vmatpush1.msra.mxu0 %v824
        %950 = vmatprep.subr.mxu0 0.0
        %951 = vmatpush1.msra.mxu0 %v825
        %952 = vmatprep.subr.mxu0 0.0
        %953 = vmatpush1.msra.mxu0 %v826
        %954 = vmatprep.subr.mxu0 0.0
        %955 = vmatpush1.msra.mxu0 %v827
        %956 = vmatprep.subr.mxu0 0.0
        %957 = vmatpush1.msra.mxu0 %v828
        %958 = vmatprep.subr.mxu0 0.0
        %959 = vmatpush1.msra.mxu0 %v829
        %960 = vmatprep.subr.mxu0 0.0
        %961 = vmatpush1.msra.mxu0 %v830
        %962 = vmatprep.subr.mxu0 0.0
        %963 = vmatpush1.msra.mxu0 %v831
        %964 = vmatprep.subr.mxu0 0.0
        %965 = vmatpush1.msra.mxu0 %v832
        %966 = vmatprep.subr.mxu0 0.0
        %967 = vmatpush1.msra.mxu0 %v833
        %968 = vmatprep.subr.mxu0 0.0
        %969 = vmatpush1.msra.mxu0 %v834
        %970 = vmatprep.subr.mxu0 0.0
        %971 = vmatpush1.msra.mxu0 %v835
        %972 = vmatprep.subr.mxu0 0.0
        %973 = vmatpush1.msra.mxu0 %v836
        %974 = vmatprep.subr.mxu0 0.0
        %975 = vmatpush1.msra.mxu0 %v837
        %976 = vmatprep.subr.mxu0 0.0
        %977 = vmatpush1.msra.mxu0 %v838
        %978 = vmatprep.subr.mxu0 0.0
        %979 = vmatpush1.msra.mxu0 %v839
        %980 = vmatprep.subr.mxu0 0.0
        %981 = vmatpush1.msra.mxu0 %v840
        %982 = vmatprep.mubr.f32.mxu0 %v776
        %983 = vmatmul.mubr.f32.gmra.mrb[0].mxu0 %v775
        %v984 = vpop.f32.mrb[0].mxu0
        %v985 = vadd.f32 %v915, %v984
        %v986 = vpop.f32.mrb[0].mxu0
        %987 = vdwg.mxu0
        %v988 = vsub.f32 0.0, %v985
        %v989 = vmul.f32 %v988, 1.442695
        %v990 = vpow.pop %v989
        %v991 = vadd.f32 %v990, 1.0
        %v992 = vrcp.pop %v991
        %v993 = vmul.f32 1.0, %v992
        %v994 = vld [vmem:[%s7] sm:$0xff]
        %vm995 = vcmask 64512
        %v997 = vsel %vm995, %v993, 0
        %999 = vmatprep.subr.mxu0 0.0
        %1000 = vmatpush1.msra.mxu0 %v994
        %1001 = vmatprep.subr.mxu0 0.0
        %1002 = vmatpush1.msra.mxu0 0.0
        %1003 = vmatprep.subr.mxu0 0.0
        %1004 = vmatpush1.msra.mxu0 0.0
        %1005 = vmatprep.subr.mxu0 0.0
        %1006 = vmatpush1.msra.mxu0 0.0
        %1007 = vmatprep.subr.mxu0 0.0
        %1008 = vmatpush1.msra.mxu0 0.0
        %1009 = vmatprep.subr.mxu0 0.0
        %1010 = vmatpush1.msra.mxu0 0.0
        %1011 = vmatprep.subr.mxu0 0.0
        %1012 = vmatpush1.msra.mxu0 0.0
        %1013 = vmatprep.subr.mxu0 0.0
        %1014 = vmatpush1.msra.mxu0 0.0
        %1015 = vmatprep.subr.mxu0 0.0
        %1016 = vmatpush1.msra.mxu0 0.0
        %1017 = vmatprep.subr.mxu0 0.0
        %1018 = vmatpush1.msra.mxu0 0.0
        %1019 = vmatprep.subr.mxu0 0.0
        %1020 = vmatpush1.msra.mxu0 0.0
        %1021 = vmatprep.subr.mxu0 0.0
        %1022 = vmatpush1.msra.mxu0 0.0
        %1023 = vmatprep.subr.mxu0 0.0
        %1024 = vmatpush1.msra.mxu0 0.0
        %1025 = vmatprep.subr.mxu0 0.0
        %1026 = vmatpush1.msra.mxu0 0.0
        %1027 = vmatprep.subr.mxu0 0.0
        %1028 = vmatpush1.msra.mxu0 0.0
        %1029 = vmatprep.subr.mxu0 0.0
        %1030 = vmatpush1.msra.mxu0 0.0
        %1031 = vmatprep.subr.mxu0 0.0
        %1032 = vmatpush1.msra.mxu0 0.0
        %1033 = vmatprep.subr.mxu0 0.0
        %1034 = vmatpush1.msra.mxu0 0.0
        %1035 = vmatprep.subr.mxu0 0.0
        %1036 = vmatpush1.msra.mxu0 0.0
        %1037 = vmatprep.subr.mxu0 0.0
        %1038 = vmatpush1.msra.mxu0 0.0
        %1039 = vmatprep.subr.mxu0 0.0
        %1040 = vmatpush1.msra.mxu0 0.0
        %1041 = vmatprep.subr.mxu0 0.0
        %1042 = vmatpush1.msra.mxu0 0.0
        %1043 = vmatprep.subr.mxu0 0.0
        %1044 = vmatpush1.msra.mxu0 0.0
        %1045 = vmatprep.subr.mxu0 0.0
        %1046 = vmatpush1.msra.mxu0 0.0
        %1047 = vmatprep.subr.mxu0 0.0
        %1048 = vmatpush1.msra.mxu0 0.0
        %1049 = vmatprep.subr.mxu0 0.0
        %1050 = vmatpush1.msra.mxu0 0.0
        %1051 = vmatprep.subr.mxu0 0.0
        %1052 = vmatpush1.msra.mxu0 0.0
        %1053 = vmatprep.subr.mxu0 0.0
        %1054 = vmatpush1.msra.mxu0 0.0
        %1055 = vmatprep.subr.mxu0 0.0
        %1056 = vmatpush1.msra.mxu0 0.0
        %1057 = vmatprep.subr.mxu0 0.0
        %1058 = vmatpush1.msra.mxu0 0.0
        %1059 = vmatprep.subr.mxu0 0.0
        %1060 = vmatpush1.msra.mxu0 0.0
        %1061 = vmatprep.subr.mxu0 0.0
        %1062 = vmatpush1.msra.mxu0 0.0
        %1063 = vmatprep.mubr.f32.mxu0 0.0
        %1064 = vmatmul.mubr.f32.gmra.mrb[0].mxu0 %v997
        %v1065 = vpop.f32.mrb[0].mxu0
        %v1066 = vadd.f32 0.0, %v1065
        %v1067 = vpop.f32.mrb[0].mxu0
        %1068 = vdwg.mxu0
        %v1069 = vsub.f32 %v333, %v334
        %v1070 = vmul.f32 %v1066, %v1069
        %v1071 = vadd.f32 %v334, %v1070
        %1072 = vst [vmem:[%s324] sm:$0xff] %v1071
        %s1073 = sand.u32 %s209, 1
        %s1074 = scalar_lea.sflag [#allocation4], %s1073
        %s1075 = sand.u32 %s209, 1
        %s1076 = smul.addr %s1075, 8
        %s1077 = scalar_lea.vmem [#allocation5], %s1076
        // Predicated region
        $region57: #{tpu_custom_call.1} parent=51 // pred_check
          %p1078 = pneg %p219
        $region58: #{tpu_custom_call.1} parent=51 // pred_check_branch
          %1080 = sbr.rel (%p1078) target = $region60
        $region59: #{tpu_custom_call.1} parent=51 // pred_region
          %s1082 = ssub.s32 128, 128
          %1083 = vsyncadd %s1074, %s1082
          %s1084 = smul.addr %s23, 128
          %s1085 = scalar_lea.hbm %s8, %s1084
          %s1087 = sshll.u32 %s1077, 4
          %s1088 = int_to_ptr.vmem [resolvable:$true] %s1087
          %1090 = dma.vmem_to_hbm [thread:$0]  %s1088, 128, %s1085, %s1074
        $region60: #{tpu_custom_call.1} parent=51 // pred_fallthru
          _
      $region52: #{tpu_custom_call.1} parent=5 // pred_fallthru
        _
      %p1091 = scmp.le.s32.totalorder 2, %s18
      // Predicated region
      $region61: #{tpu_custom_call.1} parent=5 // pred_check
        %p1092 = pneg %p1091
      $region62: #{tpu_custom_call.1} parent=5 // pred_check_branch
        %1094 = sbr.rel (%p1092) target = $region64
      $region63: #{tpu_custom_call.1} parent=5 // pred_region
        %s1095 = ssub.s32 %s18, 2
        // Predicated region
        $region65: #{tpu_custom_call.1} parent=63 // pred_check
          %p1096 = pneg %p225
        $region66: #{tpu_custom_call.1} parent=63 // pred_check_branch
          %1098 = sbr.rel (%p1096) target = $region68
        $region67: #{tpu_custom_call.1} parent=63 // pred_region
          %s1099 = sand.u32 %s210, 1
          %s1100 = scalar_lea.sflag [#allocation4], %s1099
          %s1101 = sand.u32 %s210, 1
          %s1102 = smul.addr %s1101, 8
          %s1103 = scalar_lea.vmem [#allocation5], %s1102
          %1104 = dma.done %s1100, 128
        $region68: #{tpu_custom_call.1} parent=63 // pred_fallthru
          _
      $region64: #{tpu_custom_call.1} parent=5 // pred_fallthru
        _
    $region6: #{tpu_custom_call.1} parent=1 // loop_footer
      %s22 = sadd.s32 1, %s18
    $region7: #{tpu_custom_call.1} parent=1 // loop_footer_branch
      %17 = sbr.rel target = $region3
    $region8: #{tpu_custom_call.1} parent=1 // loop_exit
      _
    %1105 = vsyncpa [#allocation3], 1
    %s1106 = scalar_lea.sflag [#allocation3], 1
    %1107 = vsyncpa %s1106, 1
    %1108 = vsyncpa [#allocation4], 1
    %s1109 = scalar_lea.sflag [#allocation4], 1
    %1110 = vsyncpa %s1109, 1

</llo_original>
